<compile_context>
chip_gen: v7x
topology: tpu7x:2x2x1
jax: 0.10.0
libtpu: 0.0.40
codegen_flags: <defaults>
</compile_context>

<pallas_src>
import functools

import jax
import jax.numpy as jnp
from jax import lax
from jax.experimental import pallas as pl
from jax.experimental.pallas import tpu as pltpu


def _make_kernel(tile_hw, hw_total, acc_dtype, ragged):
    """Build the kernel for a fixed (static) tiling."""
    n_chunks = tile_hw // 128

    def kernel(x_ref, w1_ref, w2_ref, o_ref, acc_ref):
        # x_ref  : (b_tile, C, tile_hw)   native dtype
        # w1_ref : (hidden, C)            f32
        # w2_ref : (out, hidden)          f32
        # o_ref  : (b_tile, out)          f32
        # acc_ref: (b_tile, C, 128)       acc_dtype lane-wide running max
        hw = pl.program_id(1)
        n_hw = pl.num_programs(1)

        @pl.when(hw == 0)
        def _init():
            acc_ref[...] = jnp.full(acc_ref.shape, -jnp.inf, acc_ref.dtype)

        def tile_max(masked):
            # Stream 128-lane chunks straight from the Ref; keep only a few
            # partial maxima live (tree combine) to avoid vreg spills.
            n_par = min(4, n_chunks)
            parts = [None] * n_par
            neg = jnp.array(-jnp.inf, dtype=acc_dtype)
            for j in range(n_chunks):
                start = j * 128
                chunk = x_ref[:, :, start:start + 128].astype(acc_dtype)
                if masked:
                    lane = lax.broadcasted_iota(jnp.int32, chunk.shape, 2)
                    gidx = hw * tile_hw + start + lane
                    chunk = jnp.where(gidx < hw_total, chunk, neg)
                k = j % n_par
                parts[k] = chunk if parts[k] is None else jnp.maximum(parts[k], chunk)
            while len(parts) > 1:
                nxt = [jnp.maximum(parts[i], parts[i + 1])
                       for i in range(0, len(parts) - 1, 2)]
                if len(parts) % 2:
                    nxt.append(parts[-1])
                parts = nxt
            acc_ref[...] = jnp.maximum(acc_ref[...], parts[0])

        if ragged:
            # Mask (compare+select) only on the last HW step.
            @pl.when(hw != n_hw - 1)
            def _full_tiles():
                tile_max(False)

            @pl.when(hw == n_hw - 1)
            def _last_tile():
                tile_max(True)
        else:
            tile_max(False)

        @pl.when(hw == n_hw - 1)
        def _finalize():
            # Single cross-lane (XLU) reduce -> pooled (b_tile, C) in f32.
            pooled = jnp.max(acc_ref[...].astype(jnp.float32), axis=-1)
            # fc1 (1x1 conv == channel matmul, contract over C) + ReLU.
            h = lax.dot_general(pooled, w1_ref[...],
                                (((1,), (1,)), ((), ())),
                                preferred_element_type=jnp.float32)
            h = jnp.maximum(h, 0.0)
            # fc2 (1x1 conv) + sigmoid.
            out = lax.dot_general(h, w2_ref[...],
                                  (((1,), (1,)), ((), ())),
                                  preferred_element_type=jnp.float32)
            o_ref[...] = jax.nn.sigmoid(out).astype(o_ref.dtype)

    return kernel


def _choose_tiling(B, C, HW, x_itemsize, acc_itemsize, w_bytes):
    """Jointly pick (b_tile, tile_hw) under a v7x-safe VMEM budget."""
    VMEM_BUDGET = 40 << 20    # conservative for v7x's 64 MiB physical VMEM
    TARGET_BLOCK = 6 << 20    # ~6 MiB / input buffer -> near HBM roofline
    MAX_CHUNKS = 64           # bound static unroll length of the chunk loop
    hw_rounded = pl.cdiv(HW, 128) * 128
    max_chunks_hw = hw_rounded // 128

    # Batch-tile candidates, best first.  The batch axis is the only "parallel"
    # grid axis, so prefer >= 2 batch blocks (v7x: 2 TensorCores), with b_tile a
    # multiple of 8 (output sublane rule) that divides B.  Full-extent B is the
    # always-legal fallback.
    cands = []
    if B >= 16:
        bt = min(B // 2, 256) // 8 * 8
        while bt >= 8:
            if B % bt == 0 and bt not in cands:
                cands.append(bt)
            bt -= 8
    if B % 8 == 0 and 8 not in cands and 8 <= B:
        cands.append(8)
    if B not in cands:
        cands.append(B)

    for bt in cands:
        per_chunk = bt * C * 128 * x_itemsize            # one 128-lane slab of x
        acc_bytes = bt * C * 128 * acc_itemsize          # running-max scratch
        fixed = acc_bytes + 2 * w_bytes + (2 << 20)      # weights + margin
        room = VMEM_BUDGET - fixed
        if room < 2 * per_chunk:                         # can't double-buffer 128 lanes
            continue
        max_chunks_budget = (room // 2) // per_chunk
        tgt_chunks = max(1, TARGET_BLOCK // per_chunk)
        n_chunks = int(min(max_chunks_budget, tgt_chunks, max_chunks_hw, MAX_CHUNKS))
        return bt, n_chunks * 128

    # Extreme C*B fallback: smallest legal batch tile, one 128-lane chunk.
    bt = 8 if (B % 8 == 0 and B >= 8) else B
    return bt, 128


def channel_attention(x_nchw, w1, w2):
    """x_nchw: (B, C, H, W); w1: (hidden, C); w2: (out, hidden) -> (B, out, 1, 1)."""
    B, C, H, W = x_nchw.shape
    hidden = w1.shape[0]
    out_planes = w2.shape[0]
    HW = H * W

    x_dtype = x_nchw.dtype
    if not jnp.issubdtype(x_dtype, jnp.floating):
        x_nchw = x_nchw.astype(jnp.float32)
        x_dtype = jnp.float32
    x_itemsize = jnp.dtype(x_dtype).itemsize

    # bf16 max is exact -> keep the accumulator in bf16 for bf16 inputs
    # (halves acc VMEM + vreg pressure); everything else accumulates in f32.
    acc_dtype = jnp.bfloat16 if x_dtype == jnp.bfloat16 else jnp.float32
    acc_itemsize = jnp.dtype(acc_dtype).itemsize

    w1f = w1.astype(jnp.float32)
    w2f = w2.astype(jnp.float32)
    w_bytes = (hidden * C + out_planes * hidden) * 4

    b_tile, tile_hw = _choose_tiling(B, C, HW, x_itemsize, acc_itemsize, w_bytes)
    ragged = (HW % tile_hw) != 0

    x_flat = x_nchw.reshape(B, C, HW)          # no padding: ragged tile masked in-kernel
    grid = (B // b_tile, pl.cdiv(HW, tile_hw))

    # VMEM limit derived from the actual allocation (+ margin for compiler scratch).
    x_block_bytes = b_tile * C * tile_hw * x_itemsize
    acc_bytes = b_tile * C * 128 * acc_itemsize
    out_bytes = b_tile * out_planes * 4
    vmem_limit = (2 * x_block_bytes + acc_bytes + 2 * w_bytes + 2 * out_bytes
                  + (4 << 20))
    vmem_limit = int(max(vmem_limit, 16 << 20))

    kernel = _make_kernel(tile_hw, HW, acc_dtype, ragged)

    out = pl.pallas_call(
        kernel,
        out_shape=jax.ShapeDtypeStruct((B, out_planes), jnp.float32),
        grid=grid,
        in_specs=[
            pl.BlockSpec((b_tile, C, tile_hw), lambda b, k: (b, 0, k)),
            pl.BlockSpec((hidden, C), lambda b, k: (0, 0)),
            pl.BlockSpec((out_planes, hidden), lambda b, k: (0, 0)),
        ],
        out_specs=pl.BlockSpec((b_tile, out_planes), lambda b, k: (b, 0)),
        scratch_shapes=[pltpu.VMEM((b_tile, C, 128), acc_dtype)],
        compiler_params=pltpu.CompilerParams(
            dimension_semantics=("parallel", "arbitrary"),
            vmem_limit_bytes=vmem_limit,
        ),
    )(x_flat, w1f, w2f)

    return out.reshape(B, out_planes, 1, 1)


def reference(x_nchw, w1, w2):
    x32 = x_nchw.astype(jnp.float32)
    pooled = jnp.max(x32, axis=(2, 3))                                # (B, C)
    h = jnp.maximum(pooled @ w1.astype(jnp.float32).T, 0.0)           # (B, hidden)
    return jax.nn.sigmoid(h @ w2.astype(jnp.float32).T)[:, :, None, None]


if __name__ == "__main__":
    # in_planes must be >= 16 so in_planes // 16 >= 1 (module hardcodes ratio 16).
    B, in_planes, out_planes, H, W = 2, 32, 32, 16, 16
    hidden = in_planes // 16

    key = jax.random.PRNGKey(0)
    kx, k1, k2 = jax.random.split(key, 3)
    x = jax.random.normal(kx, (B, in_planes, H, W), dtype=jnp.float32)
    # Conv2d 1x1, no bias -> weights of shape (out_ch, in_ch).
    w1 = jax.random.normal(k1, (hidden, in_planes), dtype=jnp.float32) * 0.1
    w2 = jax.random.normal(k2, (out_planes, hidden), dtype=jnp.float32) * 0.1

    y = jax.block_until_ready(channel_attention(x, w1, w2))
    y_ref = reference(x, w1, w2)
    assert y.shape == (B, out_planes, 1, 1)
    assert jnp.allclose(y, y_ref, atol=1e-5, rtol=1e-5)

    # Exercise the in-kernel ragged-tile masking path (H*W not a multiple of 128).
    x2 = jax.random.normal(kx, (B, in_planes, 10, 10), dtype=jnp.float32)
    y2 = jax.block_until_ready(channel_attention(x2, w1, w2))
    y2_ref = reference(x2, w1, w2)
    assert jnp.allclose(y2, y2_ref, atol=1e-5, rtol=1e-5)

    # bf16 input path (bf16 running-max accumulator, f32 finalize).
    x3 = jax.random.normal(kx, (B, in_planes, 14, 14), dtype=jnp.bfloat16)
    y3 = jax.block_until_ready(channel_attention(x3, w1, w2))
    y3_ref = reference(x3, w1, w2)
    assert jnp.allclose(y3, y3_ref, atol=2e-2, rtol=2e-2)

    print("KERNEL_OK")
</pallas_src>

<mosaic_0001>
module attributes {stable_mosaic.version = 11 : i64} {
  func.func @kernel(%arg0: i32, %arg1: i32, %arg2: memref<2x32x256xf32, #tpu.memory_space<vmem>>, %arg3: memref<2x32xf32, #tpu.memory_space<vmem>>, %arg4: memref<32x2xf32, #tpu.memory_space<vmem>>, %arg5: memref<2x32xf32, #tpu.memory_space<vmem>>, %arg6: memref<2x32x128xf32, #tpu.memory_space<vmem>>) attributes {dimension_semantics = [#tpu.dimension_semantics<parallel>, #tpu.dimension_semantics<arbitrary>], iteration_bounds = array<i64: 1, 1>, scalar_prefetch = 0 : i64, scratch_operands = 1 : i64, tpu.core_type = #tpu.core_type<tc>, window_params = [{transform_indices = @transform_0, window_bounds = array<i64: 2, 32, 256>}, {pipeline_mode = #tpu.pipeline_mode<synchronous>, transform_indices = @transform_1, window_bounds = array<i64: 2, 32>}, {pipeline_mode = #tpu.pipeline_mode<synchronous>, transform_indices = @transform_2, window_bounds = array<i64: 32, 2>}, {transform_indices = @transform_3, window_bounds = array<i64: 2, 32>}]} {
    %c0_i32 = arith.constant 0 : i32
    %0 = arith.cmpi eq, %arg1, %c0_i32 : i32
    %1 = arith.extui %0 : i1 to i32
    %c0_i32_0 = arith.constant 0 : i32
    %2 = arith.cmpi ne, %1, %c0_i32_0 : i32
    scf.if %2 {
      %cst = arith.constant 0xFF800000 : f32
      %12 = vector.broadcast %cst : f32 to vector<2x32x128xf32>
      %c0_13 = arith.constant 0 : index
      %c0_14 = arith.constant 0 : index
      %c0_15 = arith.constant 0 : index
      %13 = vector.load %arg6[%c0_13, %c0_14, %c0_15] : memref<2x32x128xf32, #tpu.memory_space<vmem>>, vector<2x32x128xf32>
      tpu.vector_store %arg6[%c0_13, %c0_14, %c0_15], %12 {strides = array<i32>} : memref<2x32x128xf32, #tpu.memory_space<vmem>>, vector<2x32x128xf32>,
    } else {
    }
    %c0 = arith.constant 0 : index
    %c0_1 = arith.constant 0 : index
    %c0_2 = arith.constant 0 : index
    %3 = vector.load %arg2[%c0, %c0_1, %c0_2] : memref<2x32x256xf32, #tpu.memory_space<vmem>>, vector<2x32x128xf32>
    %c0_3 = arith.constant 0 : index
    %c0_4 = arith.constant 0 : index
    %c128 = arith.constant 128 : index
    %4 = vector.load %arg2[%c0_3, %c0_4, %c128] : memref<2x32x256xf32, #tpu.memory_space<vmem>>, vector<2x32x128xf32>
    %5 = arith.maximumf %3, %4 : vector<2x32x128xf32>
    %c0_5 = arith.constant 0 : index
    %c0_6 = arith.constant 0 : index
    %c0_7 = arith.constant 0 : index
    %6 = vector.load %arg6[%c0_5, %c0_6, %c0_7] : memref<2x32x128xf32, #tpu.memory_space<vmem>>, vector<2x32x128xf32>
    %7 = arith.maximumf %6, %5 : vector<2x32x128xf32>
    %c0_8 = arith.constant 0 : index
    %c0_9 = arith.constant 0 : index
    %c0_10 = arith.constant 0 : index
    %8 = vector.load %arg6[%c0_8, %c0_9, %c0_10] : memref<2x32x128xf32, #tpu.memory_space<vmem>>, vector<2x32x128xf32>
    tpu.vector_store %arg6[%c0_8, %c0_9, %c0_10], %7 {strides = array<i32>} : memref<2x32x128xf32, #tpu.memory_space<vmem>>, vector<2x32x128xf32>,
    %c0_i32_11 = arith.constant 0 : i32
    %9 = arith.cmpi eq, %arg1, %c0_i32_11 : i32
    %10 = arith.extui %9 : i1 to i32
    %c0_i32_12 = arith.constant 0 : i32
    %11 = arith.cmpi ne, %10, %c0_i32_12 : i32
    scf.if %11 {
      %c0_13 = arith.constant 0 : index
      %c0_14 = arith.constant 0 : index
      %c0_15 = arith.constant 0 : index
      %12 = vector.load %arg6[%c0_13, %c0_14, %c0_15] : memref<2x32x128xf32, #tpu.memory_space<vmem>>, vector<2x32x128xf32>
      %cst = arith.constant dense<0xFF800000> : vector<2x32xf32>
      %13 = vector.multi_reduction <maximumf>, %12, %cst [2] : vector<2x32x128xf32> to vector<2x32xf32>
      %c0_16 = arith.constant 0 : index
      %c0_17 = arith.constant 0 : index
      %14 = vector.load %arg3[%c0_16, %c0_17] : memref<2x32xf32, #tpu.memory_space<vmem>>, vector<2x32xf32>
      %cst_18 = arith.constant dense<0.000000e+00> : vector<2x2xf32>
      %15 = tpu.matmul %13, %14, %cst_18 {dimension_numbers = #tpu.dot_dimension_numbers<[1], [1], [0], [0], [0, 0, 1, 0], [], []>} : vector<2x32xf32>, vector<2x32xf32>, vector<2x2xf32> -> vector<2x2xf32>
      %cst_19 = arith.constant 0.000000e+00 : f32
      %16 = vector.broadcast %cst_19 : f32 to vector<2x2xf32>
      %17 = arith.maximumf %15, %16 : vector<2x2xf32>
      %c0_20 = arith.constant 0 : index
      %c0_21 = arith.constant 0 : index
      %18 = vector.load %arg4[%c0_20, %c0_21] : memref<32x2xf32, #tpu.memory_space<vmem>>, vector<32x2xf32>
      %cst_22 = arith.constant dense<0.000000e+00> : vector<2x32xf32>
      %19 = tpu.matmul %17, %18, %cst_22 {dimension_numbers = #tpu.dot_dimension_numbers<[1], [1], [0], [0], [0, 0, 1, 0], [], []>} : vector<2x2xf32>, vector<32x2xf32>, vector<2x32xf32> -> vector<2x32xf32>
      %20 = arith.negf %19 : vector<2x32xf32>
      %21 = math.exp %20 : vector<2x32xf32>
      %cst_23 = arith.constant 1.000000e+00 : f32
      %22 = vector.broadcast %cst_23 : f32 to vector<2x32xf32>
      %23 = arith.addf %22, %21 : vector<2x32xf32>
      %24 = arith.divf %22, %23 : vector<2x32xf32>
      %c0_24 = arith.constant 0 : index
      %c0_25 = arith.constant 0 : index
      %25 = vector.load %arg5[%c0_24, %c0_25] : memref<2x32xf32, #tpu.memory_space<vmem>>, vector<2x32xf32>
      tpu.vector_store %arg5[%c0_24, %c0_25], %24 {strides = array<i32>} : memref<2x32xf32, #tpu.memory_space<vmem>>, vector<2x32xf32>,
    } else {
    }
    return
  }
  func.func @transform_0(%arg0: i32, %arg1: i32) -> (i32, i32, i32) {
    %c0_i32 = arith.constant 0 : i32
    %c0_i32_0 = arith.constant 0 : i32
    return %arg0, %c0_i32, %arg1 : i32, i32, i32
  }
  func.func @transform_1(%arg0: i32, %arg1: i32) -> (i32, i32) {
    %c0_i32 = arith.constant 0 : i32
    %c0_i32_0 = arith.constant 0 : i32
    %c0_i32_1 = arith.constant 0 : i32
    return %c0_i32, %c0_i32_0 : i32, i32
  }
  func.func @transform_2(%arg0: i32, %arg1: i32) -> (i32, i32) {
    %c0_i32 = arith.constant 0 : i32
    %c0_i32_0 = arith.constant 0 : i32
    %c0_i32_1 = arith.constant 0 : i32
    return %c0_i32, %c0_i32_0 : i32, i32
  }
  func.func @transform_3(%arg0: i32, %arg1: i32) -> (i32, i32) {
    %c0_i32 = arith.constant 0 : i32
    %c0_i32_0 = arith.constant 0 : i32
    return %arg0, %c0_i32 : i32, i32
  }
}

</mosaic_0001>

<llo_original>
// kernel: tpu_custom_call.1
$region0: #{tpu_custom_call.1}
  #allocation0 [shape = 'u32[]', space=smem, size = 0x4, offset = 0x4, fixed_abs, tag = 'smem constant byte address 0x4 - core index']
  #allocation1 [shape = 'u32[144,128]{1,0:T(1,128)}', space=vmem, size = 0x12000, scoped, tag = 'internal scratch']
  #allocation2 [shape = 'f32[2,32,128]{2,1,0:T(8,128)}', space=vmem, size = 0x8000, scoped, tag = 'scratch operand']
  %s0 = inlined_call_operand.hbm [shape: f32[2,32,256], index: 0, kind: input, shape index: {}]
  %s1 = inlined_call_operand.vmem [shape: f32[2,32], index: 1, kind: input, shape index: {}]
  %s2 = inlined_call_operand.vmem [shape: f32[32,2], index: 2, kind: input, shape index: {}]
  %s3 = inlined_call_operand.hbm [shape: f32[2,32], index: 3, kind: output, shape index: {}]
  %s4 = sld [smem:[#allocation0]]
  $region34: #{tpu_custom_call.1} parent=0
    _
  %s6 = ssub.s32 1, %s4
  %s7 = scalar_select 0, %s6, %s4
  $region1: #{tpu_custom_call.1} parent=0
    #allocation3 [shape = 'u8[65536]{0}', space=vmem, size = 0x10000, scoped, tag = 'input window, operand 0, single buffered']
    #allocation4 [shape = 's32[1]{0}', space=sflag, size = 0x4, scoped, tag = 'scoped memory for tpu_custom_call.1']
    #allocation5 [shape = 's32[1]{0}', space=sflag, size = 0x4, scoped, tag = 'scoped memory for tpu_custom_call.1']
    #allocation6 [shape = 'u8[1024]{0}', space=vmem, size = 0x400, scoped, tag = 'output window, operand 0, single buffered']
    %8 = vsyncpa [#allocation4], 0
    %9 = vsyncpa [#allocation5], 0
    // Predicated region
    $region2: #{tpu_custom_call.1} parent=1 // pred_check
      _
    $region3: #{tpu_custom_call.1} parent=1 // pred_check_branch
      %11 = sbr.rel (0) target = $region5
    $region4: #{tpu_custom_call.1} parent=1 // pred_region
      %s13 = ssub.s32 2048, 2048
      %14 = vsyncadd [#allocation4], %s13
      %s15 = sshll.u32 [#allocation3], 4
      %s16 = int_to_ptr.vmem [resolvable:$true] %s15
      %21 = dma.hbm_to_vmem [thread:$0]  %s0, 2048, %s16, [#allocation4], 256, 256, 16
    $region5: #{tpu_custom_call.1} parent=1 // pred_fallthru
      _
    // Predicated region
    $region6: #{tpu_custom_call.1} parent=1 // pred_check
      _
    $region7: #{tpu_custom_call.1} parent=1 // pred_check_branch
      %23 = sbr.rel (0) target = $region9
    $region8: #{tpu_custom_call.1} parent=1 // pred_region
      _
    $region9: #{tpu_custom_call.1} parent=1 // pred_fallthru
      _
    // Predicated region
    $region10: #{tpu_custom_call.1} parent=1 // pred_check
      _
    $region11: #{tpu_custom_call.1} parent=1 // pred_check_branch
      %25 = sbr.rel (0) target = $region13
    $region12: #{tpu_custom_call.1} parent=1 // pred_region
      _
    $region13: #{tpu_custom_call.1} parent=1 // pred_fallthru
      _
    // Predicated region
    $region14: #{tpu_custom_call.1} parent=1 // pred_check
      _
    $region15: #{tpu_custom_call.1} parent=1 // pred_check_branch
      %27 = sbr.rel (0) target = $region17
    $region16: #{tpu_custom_call.1} parent=1 // pred_region
      %28 = dma.done [#allocation4], 2048
    $region17: #{tpu_custom_call.1} parent=1 // pred_fallthru
      _
    %p29 = scmp.eq.s32.totalorder 0, 0
    // Predicated region
    $region18: #{tpu_custom_call.1} parent=1 // pred_check
      %p30 = pneg %p29
    $region19: #{tpu_custom_call.1} parent=1 // pred_check_branch
      %32 = sbr.rel (%p30) target = $region21
    $region20: #{tpu_custom_call.1} parent=1 // pred_region
      %33 = vst [vmem:[#allocation2] sm:$0xff] -inf
      %34 = vst [vmem:[#allocation2 + $0x8] sm:$0xff] -inf
      %35 = vst [vmem:[#allocation2 + $0x10] sm:$0xff] -inf
      %36 = vst [vmem:[#allocation2 + $0x18] sm:$0xff] -inf
      %37 = vst [vmem:[#allocation2 + $0x20] sm:$0xff] -inf
      %38 = vst [vmem:[#allocation2 + $0x28] sm:$0xff] -inf
      %39 = vst [vmem:[#allocation2 + $0x30] sm:$0xff] -inf
      %40 = vst [vmem:[#allocation2 + $0x38] sm:$0xff] -inf
    $region21: #{tpu_custom_call.1} parent=1 // pred_fallthru
      _
    %v41 = vld [vmem:[#allocation3] sm:$0xff]
    %v42 = vld [vmem:[#allocation3 + $0x10] sm:$0xff]
    %v43 = vld [vmem:[#allocation3 + $0x20] sm:$0xff]
    %v44 = vld [vmem:[#allocation3 + $0x30] sm:$0xff]
    %v45 = vld [vmem:[#allocation3 + $0x40] sm:$0xff]
    %v46 = vld [vmem:[#allocation3 + $0x50] sm:$0xff]
    %v47 = vld [vmem:[#allocation3 + $0x60] sm:$0xff]
    %v48 = vld [vmem:[#allocation3 + $0x70] sm:$0xff]
    %v49 = vld [vmem:[#allocation3 + $0x8] sm:$0xff]
    %v50 = vld [vmem:[#allocation3 + $0x18] sm:$0xff]
    %v51 = vld [vmem:[#allocation3 + $0x28] sm:$0xff]
    %v52 = vld [vmem:[#allocation3 + $0x38] sm:$0xff]
    %v53 = vld [vmem:[#allocation3 + $0x48] sm:$0xff]
    %v54 = vld [vmem:[#allocation3 + $0x58] sm:$0xff]
    %v55 = vld [vmem:[#allocation3 + $0x68] sm:$0xff]
    %v56 = vld [vmem:[#allocation3 + $0x78] sm:$0xff]
    %v57 = vmax.f32 %v41, %v49
    %v58 = vmax.f32 %v42, %v50
    %v59 = vmax.f32 %v43, %v51
    %v60 = vmax.f32 %v44, %v52
    %v61 = vmax.f32 %v45, %v53
    %v62 = vmax.f32 %v46, %v54
    %v63 = vmax.f32 %v47, %v55
    %v64 = vmax.f32 %v48, %v56
    %v65 = vld [vmem:[#allocation2] sm:$0xff]
    %v66 = vld [vmem:[#allocation2 + $0x8] sm:$0xff]
    %v67 = vld [vmem:[#allocation2 + $0x10] sm:$0xff]
    %v68 = vld [vmem:[#allocation2 + $0x18] sm:$0xff]
    %v69 = vld [vmem:[#allocation2 + $0x20] sm:$0xff]
    %v70 = vld [vmem:[#allocation2 + $0x28] sm:$0xff]
    %v71 = vld [vmem:[#allocation2 + $0x30] sm:$0xff]
    %v72 = vld [vmem:[#allocation2 + $0x38] sm:$0xff]
    %v73 = vmax.f32 %v65, %v57
    %v74 = vmax.f32 %v66, %v58
    %v75 = vmax.f32 %v67, %v59
    %v76 = vmax.f32 %v68, %v60
    %v77 = vmax.f32 %v69, %v61
    %v78 = vmax.f32 %v70, %v62
    %v79 = vmax.f32 %v71, %v63
    %v80 = vmax.f32 %v72, %v64
    %81 = vst [vmem:[#allocation2] sm:$0xff] %v73
    %82 = vst [vmem:[#allocation2 + $0x8] sm:$0xff] %v74
    %83 = vst [vmem:[#allocation2 + $0x10] sm:$0xff] %v75
    %84 = vst [vmem:[#allocation2 + $0x18] sm:$0xff] %v76
    %85 = vst [vmem:[#allocation2 + $0x20] sm:$0xff] %v77
    %86 = vst [vmem:[#allocation2 + $0x28] sm:$0xff] %v78
    %87 = vst [vmem:[#allocation2 + $0x30] sm:$0xff] %v79
    %88 = vst [vmem:[#allocation2 + $0x38] sm:$0xff] %v80
    // Predicated region
    $region22: #{tpu_custom_call.1} parent=1 // pred_check
      %p89 = pneg %p29
    $region23: #{tpu_custom_call.1} parent=1 // pred_check_branch
      %91 = sbr.rel (%p89) target = $region25
    $region24: #{tpu_custom_call.1} parent=1 // pred_region
      %v92 = vld [vmem:[#allocation2] sm:$0xff]
      %v93 = vld [vmem:[#allocation2 + $0x8] sm:$0xff]
      %v94 = vld [vmem:[#allocation2 + $0x10] sm:$0xff]
      %v95 = vld [vmem:[#allocation2 + $0x18] sm:$0xff]
      %v96 = vld [vmem:[#allocation2 + $0x20] sm:$0xff]
      %v97 = vld [vmem:[#allocation2 + $0x28] sm:$0xff]
      %v98 = vld [vmem:[#allocation2 + $0x30] sm:$0xff]
      %v99 = vld [vmem:[#allocation2 + $0x38] sm:$0xff]
      %100 = vmax.xlane.f32.xlu0 %v92
      %v101 = vpop.xlane.xlu0 %100
      %102 = vmax.xlane.f32.xlu0 %v93
      %v103 = vpop.xlane.xlu0 %102
      %104 = vmax.xlane.f32.xlu0 %v94
      %v105 = vpop.xlane.xlu0 %104
      %106 = vmax.xlane.f32.xlu0 %v95
      %v107 = vpop.xlane.xlu0 %106
      %108 = vmax.xlane.f32.xlu0 %v96
      %v109 = vpop.xlane.xlu0 %108
      %110 = vmax.xlane.f32.xlu0 %v97
      %v111 = vpop.xlane.xlu0 %110
      %112 = vmax.xlane.f32.xlu0 %v98
      %v113 = vpop.xlane.xlu0 %112
      %114 = vmax.xlane.f32.xlu0 %v99
      %v115 = vpop.xlane.xlu0 %114
      %v116 = vld [vmem:[%s1] sm:$0x3]
      %v125 = vlaneseq
      %v126 = vand.u32 %v125, 127
      %v127 = vlaneseq
      %v128 = vshrl.u32 %v127, 7
      %v129 = vsub.s32 %v126, %v128
      %v130 = vrot.slane %v101, %v129
      %v131 = vadd.s32 %v126, 4294967288
      %v132 = vlaneseq
      %v133 = vshrl.u32 %v132, 7
      %v134 = vsub.s32 %v131, %v133
      %v135 = vrot.slane %v103, %v134
      %vm136 = vcmask 130112
      %v137 = vsel %vm136, %v135, %v130
      %v138 = vadd.s32 %v126, 4294967280
      %v139 = vlaneseq
      %v140 = vshrl.u32 %v139, 7
      %v141 = vsub.s32 %v138, %v140
      %v142 = vrot.slane %v105, %v141
      %vm143 = vcmask 195712
      %v144 = vsel %vm143, %v142, %v137
      %v145 = vadd.s32 %v126, 4294967272
      %v146 = vlaneseq
      %v147 = vshrl.u32 %v146, 7
      %v148 = vsub.s32 %v145, %v147
      %v149 = vrot.slane %v107, %v148
      %vm150 = vcmask 261312
      %v151 = vsel %vm150, %v149, %v144
      %v152 = vlaneseq
      %v153 = vshrl.u32 %v152, 7
      %v154 = vsub.s32 %v126, %v153
      %v155 = vrot.slane %v109, %v154
      %v156 = vlaneseq
      %v157 = vshrl.u32 %v156, 7
      %v158 = vsub.s32 %v131, %v157
      %v159 = vrot.slane %v111, %v158
      %v160 = vsel %vm136, %v159, %v155
      %v161 = vlaneseq
      %v162 = vshrl.u32 %v161, 7
      %v163 = vsub.s32 %v138, %v162
      %v164 = vrot.slane %v113, %v163
      %v165 = vsel %vm143, %v164, %v160
      %v166 = vlaneseq
      %v167 = vshrl.u32 %v166, 7
      %v168 = vsub.s32 %v145, %v167
      %v169 = vrot.slane %v115, %v168
      %v170 = vsel %vm150, %v169, %v165
      %vm171 = vcmask 1041409
      %v172 = vsel %vm171, %v170, %v151
      %vm173 = vcmask 261120
      %v174 = vsel %vm173, %v172, 0
      %v177 = vsel %vm173, %v116, 0
      %179 = vmatprep.subr.mxu0 0.0
      %180 = vmatpush1.xpose.msra.mxu0 %v177
      %181 = vmatprep.subr.mxu0 0.0
      %182 = vmatpush1.xpose.msra.mxu0 0.0
      %183 = vmatprep.subr.mxu0 0.0
      %184 = vmatpush1.xpose.msra.mxu0 0.0
      %185 = vmatprep.subr.mxu0 0.0
      %186 = vmatpush1.xpose.msra.mxu0 0.0
      %187 = vmatprep.subr.mxu0 0.0
      %188 = vmatpush1.xpose.msra.mxu0 0.0
      %189 = vmatprep.subr.mxu0 0.0
      %190 = vmatpush1.xpose.msra.mxu0 0.0
      %191 = vmatprep.subr.mxu0 0.0
      %192 = vmatpush1.xpose.msra.mxu0 0.0
      %193 = vmatprep.subr.mxu0 0.0
      %194 = vmatpush1.xpose.msra.mxu0 0.0
      %195 = vmatprep.subr.mxu0 0.0
      %196 = vmatpush1.xpose.msra.mxu0 0.0
      %197 = vmatprep.subr.mxu0 0.0
      %198 = vmatpush1.xpose.msra.mxu0 0.0
      %199 = vmatprep.subr.mxu0 0.0
      %200 = vmatpush1.xpose.msra.mxu0 0.0
      %201 = vmatprep.subr.mxu0 0.0
      %202 = vmatpush1.xpose.msra.mxu0 0.0
      %203 = vmatprep.subr.mxu0 0.0
      %204 = vmatpush1.xpose.msra.mxu0 0.0
      %205 = vmatprep.subr.mxu0 0.0
      %206 = vmatpush1.xpose.msra.mxu0 0.0
      %207 = vmatprep.subr.mxu0 0.0
      %208 = vmatpush1.xpose.msra.mxu0 0.0
      %209 = vmatprep.subr.mxu0 0.0
      %210 = vmatpush1.xpose.msra.mxu0 0.0
      %211 = vmatprep.subr.mxu0 0.0
      %212 = vmatpush1.xpose.msra.mxu0 0.0
      %213 = vmatprep.subr.mxu0 0.0
      %214 = vmatpush1.xpose.msra.mxu0 0.0
      %215 = vmatprep.subr.mxu0 0.0
      %216 = vmatpush1.xpose.msra.mxu0 0.0
      %217 = vmatprep.subr.mxu0 0.0
      %218 = vmatpush1.xpose.msra.mxu0 0.0
      %219 = vmatprep.subr.mxu0 0.0
      %220 = vmatpush1.xpose.msra.mxu0 0.0
      %221 = vmatprep.subr.mxu0 0.0
      %222 = vmatpush1.xpose.msra.mxu0 0.0
      %223 = vmatprep.subr.mxu0 0.0
      %224 = vmatpush1.xpose.msra.mxu0 0.0
      %225 = vmatprep.subr.mxu0 0.0
      %226 = vmatpush1.xpose.msra.mxu0 0.0
      %227 = vmatprep.subr.mxu0 0.0
      %228 = vmatpush1.xpose.msra.mxu0 0.0
      %229 = vmatprep.subr.mxu0 0.0
      %230 = vmatpush1.xpose.msra.mxu0 0.0
      %231 = vmatprep.subr.mxu0 0.0
      %232 = vmatpush1.xpose.msra.mxu0 0.0
      %233 = vmatprep.subr.mxu0 0.0
      %234 = vmatpush1.xpose.msra.mxu0 0.0
      %235 = vmatprep.subr.mxu0 0.0
      %236 = vmatpush1.xpose.msra.mxu0 0.0
      %237 = vmatprep.subr.mxu0 0.0
      %238 = vmatpush1.xpose.msra.mxu0 0.0
      %239 = vmatprep.subr.mxu0 0.0
      %240 = vmatpush1.xpose.msra.mxu0 0.0
      %241 = vmatprep.subr.mxu0 0.0
      %242 = vmatpush1.xpose.msra.mxu0 0.0
      %243 = vmatprep.mubr.f32.mxu0 0.0
      %244 = vmatmul.mubr.f32.gmra.mrb[0].mxu0 %v174
      %v245 = vpop.f32.mrb[0].mxu0
      %v246 = vadd.f32 0.0, %v245
      %v247 = vpop.f32.mrb[0].mxu0
      %248 = vdwg.mxu0
      %v249 = vmax.f32 %v246, 0.0
      %v250 = vld [vmem:[%s2] sm:$0xff]
      %v251 = vld [vmem:[%s2 + $0x8] sm:$0xff]
      %v252 = vld [vmem:[%s2 + $0x10] sm:$0xff]
      %v253 = vld [vmem:[%s2 + $0x18] sm:$0xff]
      %vm254 = vcmask 15360
      %v256 = vsel %vm254, %v249, 0
      %v259 = vsel %vm254, %v250, 0
      %v262 = vsel %vm254, %v251, 0
      %v265 = vsel %vm254, %v252, 0
      %v268 = vsel %vm254, %v253, 0
      %270 = vmatprep.subr.mxu0 0.0
      %271 = vmatpush1.xpose.msra.mxu0 %v259
      %272 = vmatprep.subr.mxu0 0.0
      %273 = vmatpush1.xpose.msra.mxu0 %v262
      %274 = vmatprep.subr.mxu0 0.0
      %275 = vmatpush1.xpose.msra.mxu0 %v265
      %276 = vmatprep.subr.mxu0 0.0
      %277 = vmatpush1.xpose.msra.mxu0 %v268
      %278 = vmatprep.subr.mxu0 0.0
      %279 = vmatpush1.xpose.msra.mxu0 0.0
      %280 = vmatprep.subr.mxu0 0.0
      %281 = vmatpush1.xpose.msra.mxu0 0.0
      %282 = vmatprep.subr.mxu0 0.0
      %283 = vmatpush1.xpose.msra.mxu0 0.0
      %284 = vmatprep.subr.mxu0 0.0
      %285 = vmatpush1.xpose.msra.mxu0 0.0
      %286 = vmatprep.subr.mxu0 0.0
      %287 = vmatpush1.xpose.msra.mxu0 0.0
      %288 = vmatprep.subr.mxu0 0.0
      %289 = vmatpush1.xpose.msra.mxu0 0.0
      %290 = vmatprep.subr.mxu0 0.0
      %291 = vmatpush1.xpose.msra.mxu0 0.0
      %292 = vmatprep.subr.mxu0 0.0
      %293 = vmatpush1.xpose.msra.mxu0 0.0
      %294 = vmatprep.subr.mxu0 0.0
      %295 = vmatpush1.xpose.msra.mxu0 0.0
      %296 = vmatprep.subr.mxu0 0.0
      %297 = vmatpush1.xpose.msra.mxu0 0.0
      %298 = vmatprep.subr.mxu0 0.0
      %299 = vmatpush1.xpose.msra.mxu0 0.0
      %300 = vmatprep.subr.mxu0 0.0
      %301 = vmatpush1.xpose.msra.mxu0 0.0
      %302 = vmatprep.subr.mxu0 0.0
      %303 = vmatpush1.xpose.msra.mxu0 0.0
      %304 = vmatprep.subr.mxu0 0.0
      %305 = vmatpush1.xpose.msra.mxu0 0.0
      %306 = vmatprep.subr.mxu0 0.0
      %307 = vmatpush1.xpose.msra.mxu0 0.0
      %308 = vmatprep.subr.mxu0 0.0
      %309 = vmatpush1.xpose.msra.mxu0 0.0
      %310 = vmatprep.subr.mxu0 0.0
      %311 = vmatpush1.xpose.msra.mxu0 0.0
      %312 = vmatprep.subr.mxu0 0.0
      %313 = vmatpush1.xpose.msra.mxu0 0.0
      %314 = vmatprep.subr.mxu0 0.0
      %315 = vmatpush1.xpose.msra.mxu0 0.0
      %316 = vmatprep.subr.mxu0 0.0
      %317 = vmatpush1.xpose.msra.mxu0 0.0
      %318 = vmatprep.subr.mxu0 0.0
      %319 = vmatpush1.xpose.msra.mxu0 0.0
      %320 = vmatprep.subr.mxu0 0.0
      %321 = vmatpush1.xpose.msra.mxu0 0.0
      %322 = vmatprep.subr.mxu0 0.0
      %323 = vmatpush1.xpose.msra.mxu0 0.0
      %324 = vmatprep.subr.mxu0 0.0
      %325 = vmatpush1.xpose.msra.mxu0 0.0
      %326 = vmatprep.subr.mxu0 0.0
      %327 = vmatpush1.xpose.msra.mxu0 0.0
      %328 = vmatprep.subr.mxu0 0.0
      %329 = vmatpush1.xpose.msra.mxu0 0.0
      %330 = vmatprep.subr.mxu0 0.0
      %331 = vmatpush1.xpose.msra.mxu0 0.0
      %332 = vmatprep.subr.mxu0 0.0
      %333 = vmatpush1.xpose.msra.mxu0 0.0
      %334 = vmatprep.mubr.f32.mxu0 0.0
      %335 = vmatmul.mubr.f32.gmra.mrb[0].mxu0 %v256
      %v336 = vpop.f32.mrb[0].mxu0
      %v337 = vadd.f32 0.0, %v336
      %v338 = vpop.f32.mrb[0].mxu0
      %339 = vdwg.mxu0
      %v340 = vxor.u32 %v337, 2147483648
      %v341 = vmul.f32 %v340, 1.442695
      %v342 = vpow.pop %v341
      %v343 = vadd.f32 %v342, 1.0
      %v344 = vrcp.pop %v343
      %v345 = vmul.f32 1.0, %v344
      %vm346 = vcmask 254976
      %347 = vst.msk [vmem:[#allocation6] sm:$0x3] %vm346, %v345
    $region25: #{tpu_custom_call.1} parent=1 // pred_fallthru
      _
    // Predicated region
    $region26: #{tpu_custom_call.1} parent=1 // pred_check
      _
    $region27: #{tpu_custom_call.1} parent=1 // pred_check_branch
      %349 = sbr.rel (0) target = $region29
    $region28: #{tpu_custom_call.1} parent=1 // pred_region
      %s351 = ssub.s32 32, 32
      %352 = vsyncadd [#allocation5], %s351
      %s354 = sshll.u32 [#allocation6], 4
      %s355 = int_to_ptr.vmem [resolvable:$true] %s354
      %357 = dma.vmem_to_hbm [thread:$0]  %s355, 32, %s3, [#allocation5]
    $region29: #{tpu_custom_call.1} parent=1 // pred_fallthru
      _
    // Predicated region
    $region30: #{tpu_custom_call.1} parent=1 // pred_check
      _
    $region31: #{tpu_custom_call.1} parent=1 // pred_check_branch
      %359 = sbr.rel (0) target = $region33
    $region32: #{tpu_custom_call.1} parent=1 // pred_region
      %360 = dma.done [#allocation5], 32
    $region33: #{tpu_custom_call.1} parent=1 // pred_fallthru
      _
    %361 = vsyncpa [#allocation4], 1
    %362 = vsyncpa [#allocation5], 1

</llo_original>
